<compile_context>
chip_gen: v5e
topology: v5e:2x2
jax: 0.10.0
libtpu: 0.0.40
codegen_flags: <defaults>
</compile_context>

<pallas_src>
import functools

import jax
import jax.numpy as jnp
from jax import lax
from jax.experimental import pallas as pl
from jax.experimental.pallas import tpu as pltpu


# ----------------------------------------------------------------------------
# Fused Pallas kernel: generator + D(real) + D(fake) + gradient penalty
# ----------------------------------------------------------------------------
def _kgan_fused_kernel(real_ref, zin_ref, embd_ref, alpha_ref,
                       gw1_ref, gw2_ref, gb2_ref,
                       dw1a_ref, dw1b_ref, packed_ref,
                       losses_ref, fake_ref, *, lambda_gp):
    f32 = jnp.float32
    bf16 = jnp.bfloat16
    B = real_ref.shape[0]
    inv_b = 1.0 / B

    # small packed operands: rows = [g_b1, d_b1, d_w2_row, d_b2 (broadcast)]
    packed = packed_ref[...]                                  # [4, H]
    g_b1 = packed[0:1, :]
    d_b1 = packed[1:2, :]
    w2row = packed[2:3, :]
    d_b2 = packed[3:4, 0:1]                                   # [1, 1]

    dw1a = dw1a_ref[...]                                      # [Dp, H] bf16

    # ---- independent matmuls (no dependence on the generator chain): ----
    # D->H image term for the real images + label-embedding term.
    h_real_img = jnp.dot(real_ref[...].astype(bf16), dw1a,
                         preferred_element_type=f32)          # [B, H]
    emb_term = jnp.dot(embd_ref[...].astype(bf16), dw1b_ref[...],
                       preferred_element_type=f32) + d_b1     # [B, H]

    # ---------------- generator: zin -> relu -> tanh ----------------
    h1 = jnp.dot(zin_ref[...].astype(bf16), gw1_ref[...],
                 preferred_element_type=f32) + g_b1
    a1 = jnp.maximum(h1, 0.0)
    fake = jnp.tanh(jnp.dot(a1.astype(bf16), gw2_ref[...],
                            preferred_element_type=f32) + gb2_ref[...])  # [B, Dp] f32
    fake_ref[...] = fake.astype(fake_ref.dtype)               # bf16 writeback

    h_fake_img = jnp.dot(fake.astype(bf16), dw1a,
                         preferred_element_type=f32)          # [B, H]

    # ---------------- discriminator validities (real / fake only) ----------
    h_real = h_real_img + emb_term
    h_fake = h_fake_img + emb_term
    a_real = jnp.maximum(h_real, 0.2 * h_real)                # leaky_relu(0.2)
    a_fake = jnp.maximum(h_fake, 0.2 * h_fake)
    # HIDDEN->1 output layer on the VPU (elementwise mul + lane reduce)
    real_v = jnp.sum(a_real * w2row, axis=1, keepdims=True) + d_b2  # [B, 1]
    fake_v = jnp.sum(a_fake * w2row, axis=1, keepdims=True) + d_b2  # [B, 1]

    # ---------------- gradient penalty (analytic) ---------------------------
    # By linearity of the D->H layer:
    #   h_int = alpha * h_real_img + (1 - alpha) * h_fake_img + emb_term
    # (one bf16 rounding step different from cast-interp-then-matmul; fp32
    # accumulate keeps it well inside tolerance).
    alpha = alpha_ref[...]                                    # [B, 1]
    h_int = alpha * h_real_img + (1.0 - alpha) * h_fake_img + emb_term
    # d/dh leaky_relu: 1 for h>0 else 0.2 (h==0 is measure-zero; autodiff of
    # max(h, 0.2h) may pick 1.0 there — harmless).
    dleaky = jnp.where(h_int > 0, 1.0, 0.2)
    grad_h = dleaky * w2row                                   # [B, H]
    # grad_img = grad_h @ d_w1a.T via a transposed contraction on the SAME
    # d_w1a tile (no stored transpose, no extra weight DMA).
    grad_img = lax.dot_general(
        grad_h.astype(bf16), dw1a,
        dimension_numbers=(((1,), (1,)), ((), ())),
        preferred_element_type=f32)                           # [B, Dp]
    nrm = jnp.sqrt(jnp.sum(grad_img * grad_img, axis=1, keepdims=True))  # [B,1]
    gp = jnp.sum((nrm - 1.0) ** 2, axis=0, keepdims=True) * inv_b        # [1,1]

    # ---------------- losses reduced in-kernel ------------------------------
    mean_real = jnp.sum(real_v, axis=0, keepdims=True) * inv_b
    mean_fake = jnp.sum(fake_v, axis=0, keepdims=True) * inv_b
    d_loss = -mean_real + mean_fake + lambda_gp * gp
    g_loss = -mean_fake

    lane = lax.broadcasted_iota(jnp.int32, (1, 128), 1)
    losses_ref[...] = (jnp.where(lane == 0, d_loss, 0.0)
                       + jnp.where(lane == 1, g_loss, 0.0)
                       + jnp.where(lane == 2, gp, 0.0))


def _vmem_spec():
    return pl.BlockSpec(memory_space=pltpu.MemorySpace.VMEM)


def _pad_last(a, target):
    pad = target - a.shape[-1]
    if pad == 0:
        return a
    return jnp.pad(a, [(0, 0)] * (a.ndim - 1) + [(0, pad)])


# ----------------------------------------------------------------------------
# KGAN.forward equivalent (loss computation only)
# ----------------------------------------------------------------------------
def kgan_forward(x, labels, z, alpha, params, lambda_gp=10.0):
    # x: [B, C, V, T] -> permute(0, 2, 3, 1) -> [B, V, T, C] (as in forward())
    real = jnp.transpose(x, (0, 2, 3, 1)).astype(jnp.float32)
    B, V, T, C = real.shape
    D = V * T * C
    # Lane-dense padding: multiple of 256 (MXU width on v6e/v7x; also a
    # multiple of 128 for v5e). Zero padding is a mathematical no-op.
    Dp = max(256, ((D + 255) // 256) * 256)

    real_flat = _pad_last(real.reshape(B, D), Dp)
    zin = jnp.concatenate([z, params["emb_g"][labels]], axis=1)   # [B, 2Z]
    emb_d = _pad_last(params["emb_d"][labels], Dp)                # [B, Dp]

    H = params["g_b1"].shape[-1]
    # Pack the tiny H-lane operands into one array -> one DMA instead of four.
    packed = jnp.concatenate(
        [params["g_b1"], params["d_b1"], params["d_w2_row"],
         jnp.broadcast_to(params["d_b2"], (1, H))], axis=0)       # [4, H]

    # NOTE: in a real training loop the padded weights below would be
    # materialized once, not per step.
    g_w2 = _pad_last(params["g_w2"], Dp)                          # [H, Dp] bf16
    g_b2 = _pad_last(params["g_b2"], Dp)                          # [1, Dp] f32
    d_w1a = jnp.pad(params["d_w1a"], ((0, Dp - D), (0, 0)))       # [Dp, H] bf16
    d_w1b = jnp.pad(params["d_w1b"], ((0, Dp - D), (0, 0)))       # [Dp, H] bf16

    losses, fake_pad = pl.pallas_call(
        functools.partial(_kgan_fused_kernel, lambda_gp=float(lambda_gp)),
        out_shape=(jax.ShapeDtypeStruct((1, 128), jnp.float32),
                   jax.ShapeDtypeStruct((B, Dp), jnp.bfloat16)),
        in_specs=[_vmem_spec() for _ in range(10)],
        out_specs=(_vmem_spec(), _vmem_spec()),
    )(real_flat, zin, emb_d, alpha,
      params["g_w1"], g_w2, g_b2, d_w1a, d_w1b, packed)

    d_loss = losses[0, 0]
    g_loss = losses[0, 1]
    gp = losses[0, 2]
    fake_imgs = fake_pad[:, :D].astype(jnp.float32).reshape(B, V, T, C)
    return {"lossD": d_loss, "lossG": g_loss, "gp": gp, "fake_imgs": fake_imgs}


# ----------------------------------------------------------------------------
# Pure-JAX references (numerical verification)
# ----------------------------------------------------------------------------
def _ref_forward_bf16(x, labels, z, alpha, params, lambda_gp=10.0):
    """Mirrors the kernel exactly (bf16 matmul operands, fp32 elsewhere)."""
    f32, bf16 = jnp.float32, jnp.bfloat16
    real_flat = jnp.transpose(x, (0, 2, 3, 1)).astype(f32).reshape(x.shape[0], -1)

    zin = jnp.concatenate([z, params["emb_g"][labels]], axis=1)
    h1 = jnp.dot(zin.astype(bf16), params["g_w1"], preferred_element_type=f32) + params["g_b1"]
    fake = jnp.tanh(jnp.dot(jnp.maximum(h1, 0.0).astype(bf16), params["g_w2"],
                            preferred_element_type=f32) + params["g_b2"])

    emb_d = params["emb_d"][labels]
    emb_term = (jnp.dot(emb_d.astype(bf16), params["d_w1b"],
                        preferred_element_type=f32) + params["d_b1"])

    h_real_img = jnp.dot(real_flat.astype(bf16), params["d_w1a"], preferred_element_type=f32)
    h_fake_img = jnp.dot(fake.astype(bf16), params["d_w1a"], preferred_element_type=f32)

    def validity(h):
        a = jnp.maximum(h, 0.2 * h)
        return jnp.sum(a * params["d_w2_row"], axis=1, keepdims=True) + params["d_b2"]

    real_v = validity(h_real_img + emb_term)
    fake_v = validity(h_fake_img + emb_term)

    h_int = alpha * h_real_img + (1.0 - alpha) * h_fake_img + emb_term
    grad_h = jnp.where(h_int > 0, 1.0, 0.2) * params["d_w2_row"]
    grad_img = jnp.dot(grad_h.astype(bf16), jnp.transpose(params["d_w1a"]),
                       preferred_element_type=f32)
    nrm = jnp.sqrt(jnp.sum(grad_img ** 2, axis=1))
    gp = jnp.mean((nrm - 1.0) ** 2)

    d_loss = -jnp.mean(real_v) + jnp.mean(fake_v) + lambda_gp * gp
    g_loss = -jnp.mean(fake_v)
    return d_loss, g_loss, gp


def _ref_forward_fp32(x, labels, z, alpha, params, lambda_gp=10.0):
    """Full-precision reference with autodiff gradient penalty (semantics check)."""
    f32 = jnp.float32
    w = {k: v.astype(f32) for k, v in params.items()}
    real_flat = jnp.transpose(x, (0, 2, 3, 1)).astype(f32).reshape(x.shape[0], -1)

    zin = jnp.concatenate([z, w["emb_g"][labels]], axis=1)
    fake = jnp.tanh(jnp.maximum(zin @ w["g_w1"] + w["g_b1"], 0.0) @ w["g_w2"] + w["g_b2"])

    emb_d = w["emb_d"][labels]

    def disc(img):
        h = img @ w["d_w1a"] + emb_d @ w["d_w1b"] + w["d_b1"]
        a = jnp.where(h > 0, h, 0.2 * h)
        return jnp.sum(a * w["d_w2_row"], axis=1, keepdims=True) + w["d_b2"]

    real_v = disc(real_flat)
    fake_v = disc(fake)

    interp = alpha * real_flat + (1.0 - alpha) * fake
    grads = jax.grad(lambda im: jnp.sum(disc(im)))(interp)
    nrm = jnp.sqrt(jnp.sum(grads ** 2, axis=1))
    gp = jnp.mean((nrm - 1.0) ** 2)

    d_loss = -jnp.mean(real_v) + jnp.mean(fake_v) + lambda_gp * gp
    g_loss = -jnp.mean(fake_v)
    return d_loss, g_loss, gp


# ----------------------------------------------------------------------------
if __name__ == "__main__":
    B, C, V, T = 8, 6, 4, 8          # small motion-like shapes: [B, C, V, T]
    D = C * V * T                    # 192 (padded to 256 inside the wrapper)
    LATENT, HIDDEN, NUM_CLASSES = 32, 128, 4

    key = jax.random.PRNGKey(0)
    keys = jax.random.split(key, 12)
    f32, bf16 = jnp.float32, jnp.bfloat16

    params = {
        # generator: Linear(2*LATENT -> HIDDEN), Linear(HIDDEN -> D)
        "g_w1": (0.02 * jax.random.normal(keys[0], (2 * LATENT, HIDDEN), f32)).astype(bf16),
        "g_b1": jnp.zeros((1, HIDDEN), f32),
        "g_w2": (0.02 * jax.random.normal(keys[1], (HIDDEN, D), f32)).astype(bf16),
        "g_b2": jnp.zeros((1, D), f32),
        "emb_g": jax.random.normal(keys[2], (NUM_CLASSES, LATENT), f32),
        # discriminator: Linear(2*D -> HIDDEN) split into image/label blocks,
        # Linear(HIDDEN -> 1) stored as a [1, H] row (used on the VPU)
        "d_w1a": (0.02 * jax.random.normal(keys[3], (D, HIDDEN), f32)).astype(bf16),
        "d_w1b": (0.02 * jax.random.normal(keys[4], (D, HIDDEN), f32)).astype(bf16),
        "d_b1": jnp.zeros((1, HIDDEN), f32),
        "d_w2_row": 0.02 * jax.random.normal(keys[5], (1, HIDDEN), f32),
        "d_b2": jnp.zeros((1, 1), f32),
        "emb_d": jax.random.normal(keys[6], (NUM_CLASSES, D), f32),
    }

    x = jax.random.normal(keys[7], (B, C, V, T), f32)                 # batch['x']
    labels = jax.random.randint(keys[8], (B,), 0, NUM_CLASSES)        # batch['y']
    z = jax.random.normal(keys[9], (B, LATENT), f32)                  # latent noise
    alpha = jax.random.uniform(keys[10], (B, 1), f32)                 # GP mixing

    out = jax.jit(kgan_forward)(x, labels, z, alpha, params)
    jax.block_until_ready(out)

    # tight check vs. bf16-mirrored reference
    rd, rg, rgp = _ref_forward_bf16(x, labels, z, alpha, params)
    assert jnp.allclose(out["lossD"], rd, atol=5e-3, rtol=5e-3), (out["lossD"], rd)
    assert jnp.allclose(out["lossG"], rg, atol=5e-3, rtol=5e-3), (out["lossG"], rg)
    assert jnp.allclose(out["gp"], rgp, atol=5e-3, rtol=5e-3), (out["gp"], rgp)

    # loose check vs. full-fp32 autodiff reference (semantic fidelity)
    fd, fg, fgp = _ref_forward_fp32(x, labels, z, alpha, params)
    assert jnp.allclose(out["lossD"], fd, atol=5e-2, rtol=5e-2), (out["lossD"], fd)
    assert jnp.allclose(out["lossG"], fg, atol=5e-2, rtol=5e-2), (out["lossG"], fg)

    assert bool(jnp.isfinite(out["lossD"])) and bool(jnp.isfinite(out["lossG"]))
    assert out["fake_imgs"].shape == (B, V, T, C)
    print("KERNEL_OK")
</pallas_src>

<mosaic_0001>
module attributes {stable_mosaic.version = 11 : i64} {
  func.func @_kgan_fused_kernel(%arg0: memref<8x256xf32, #tpu.memory_space<vmem>>, %arg1: memref<8x64xf32, #tpu.memory_space<vmem>>, %arg2: memref<8x256xf32, #tpu.memory_space<vmem>>, %arg3: memref<8x1xf32, #tpu.memory_space<vmem>>, %arg4: memref<64x128xbf16, #tpu.memory_space<vmem>>, %arg5: memref<128x256xbf16, #tpu.memory_space<vmem>>, %arg6: memref<1x256xf32, #tpu.memory_space<vmem>>, %arg7: memref<256x128xbf16, #tpu.memory_space<vmem>>, %arg8: memref<256x128xbf16, #tpu.memory_space<vmem>>, %arg9: memref<4x128xf32, #tpu.memory_space<vmem>>, %arg10: memref<1x128xf32, #tpu.memory_space<vmem>>, %arg11: memref<8x256xbf16, #tpu.memory_space<vmem>>) attributes {dimension_semantics = [], scalar_prefetch = 0 : i64, scratch_operands = 0 : i64, tpu.core_type = #tpu.core_type<tc>} {
    %c0 = arith.constant 0 : index
    %c0_0 = arith.constant 0 : index
    %0 = vector.load %arg9[%c0, %c0_0] : memref<4x128xf32, #tpu.memory_space<vmem>>, vector<4x128xf32>
    %1 = vector.extract_strided_slice %0 {offsets = [0, 0], sizes = [1, 128], strides = [1, 1]} : vector<4x128xf32> to vector<1x128xf32>
    %2 = vector.extract_strided_slice %0 {offsets = [1, 0], sizes = [1, 128], strides = [1, 1]} : vector<4x128xf32> to vector<1x128xf32>
    %3 = vector.extract_strided_slice %0 {offsets = [2, 0], sizes = [1, 128], strides = [1, 1]} : vector<4x128xf32> to vector<1x128xf32>
    %4 = vector.extract_strided_slice %0 {offsets = [3, 0], sizes = [1, 1], strides = [1, 1]} : vector<4x128xf32> to vector<1x1xf32>
    %c0_1 = arith.constant 0 : index
    %c0_2 = arith.constant 0 : index
    %5 = vector.load %arg7[%c0_1, %c0_2] : memref<256x128xbf16, #tpu.memory_space<vmem>>, vector<256x128xbf16>
    %c0_3 = arith.constant 0 : index
    %c0_4 = arith.constant 0 : index
    %6 = vector.load %arg0[%c0_3, %c0_4] : memref<8x256xf32, #tpu.memory_space<vmem>>, vector<8x256xf32>
    %7 = arith.truncf %6 : vector<8x256xf32> to vector<8x256xbf16>
    %cst = arith.constant dense<0.000000e+00> : vector<8x128xf32>
    %8 = tpu.matmul %7, %5, %cst {dimension_numbers = #tpu.dot_dimension_numbers<[1], [0], [0], [1], [0, 0, 1, 1], [], []>} : vector<8x256xbf16>, vector<256x128xbf16>, vector<8x128xf32> -> vector<8x128xf32>
    %c0_5 = arith.constant 0 : index
    %c0_6 = arith.constant 0 : index
    %9 = vector.load %arg2[%c0_5, %c0_6] : memref<8x256xf32, #tpu.memory_space<vmem>>, vector<8x256xf32>
    %10 = arith.truncf %9 : vector<8x256xf32> to vector<8x256xbf16>
    %c0_7 = arith.constant 0 : index
    %c0_8 = arith.constant 0 : index
    %11 = vector.load %arg8[%c0_7, %c0_8] : memref<256x128xbf16, #tpu.memory_space<vmem>>, vector<256x128xbf16>
    %cst_9 = arith.constant dense<0.000000e+00> : vector<8x128xf32>
    %12 = tpu.matmul %10, %11, %cst_9 {dimension_numbers = #tpu.dot_dimension_numbers<[1], [0], [0], [1], [0, 0, 1, 1], [], []>} : vector<8x256xbf16>, vector<256x128xbf16>, vector<8x128xf32> -> vector<8x128xf32>
    %13 = vector.broadcast %2 : vector<1x128xf32> to vector<8x128xf32>
    %14 = arith.addf %12, %13 : vector<8x128xf32>
    %c0_10 = arith.constant 0 : index
    %c0_11 = arith.constant 0 : index
    %15 = vector.load %arg1[%c0_10, %c0_11] : memref<8x64xf32, #tpu.memory_space<vmem>>, vector<8x64xf32>
    %16 = arith.truncf %15 : vector<8x64xf32> to vector<8x64xbf16>
    %c0_12 = arith.constant 0 : index
    %c0_13 = arith.constant 0 : index
    %17 = vector.load %arg4[%c0_12, %c0_13] : memref<64x128xbf16, #tpu.memory_space<vmem>>, vector<64x128xbf16>
    %cst_14 = arith.constant dense<0.000000e+00> : vector<8x128xf32>
    %18 = tpu.matmul %16, %17, %cst_14 {dimension_numbers = #tpu.dot_dimension_numbers<[1], [0], [0], [1], [0, 0, 1, 1], [], []>} : vector<8x64xbf16>, vector<64x128xbf16>, vector<8x128xf32> -> vector<8x128xf32>
    %19 = vector.broadcast %1 : vector<1x128xf32> to vector<8x128xf32>
    %20 = arith.addf %18, %19 : vector<8x128xf32>
    %cst_15 = arith.constant 0.000000e+00 : f32
    %21 = vector.broadcast %cst_15 : f32 to vector<8x128xf32>
    %22 = arith.maximumf %20, %21 : vector<8x128xf32>
    %23 = arith.truncf %22 : vector<8x128xf32> to vector<8x128xbf16>
    %c0_16 = arith.constant 0 : index
    %c0_17 = arith.constant 0 : index
    %24 = vector.load %arg5[%c0_16, %c0_17] : memref<128x256xbf16, #tpu.memory_space<vmem>>, vector<128x256xbf16>
    %cst_18 = arith.constant dense<0.000000e+00> : vector<8x256xf32>
    %25 = tpu.matmul %23, %24, %cst_18 {dimension_numbers = #tpu.dot_dimension_numbers<[1], [0], [0], [1], [0, 0, 1, 1], [], []>} : vector<8x128xbf16>, vector<128x256xbf16>, vector<8x256xf32> -> vector<8x256xf32>
    %c0_19 = arith.constant 0 : index
    %c0_20 = arith.constant 0 : index
    %26 = vector.load %arg6[%c0_19, %c0_20] : memref<1x256xf32, #tpu.memory_space<vmem>>, vector<1x256xf32>
    %27 = vector.broadcast %26 : vector<1x256xf32> to vector<8x256xf32>
    %28 = arith.addf %25, %27 : vector<8x256xf32>
    %29 = math.tanh %28 : vector<8x256xf32>
    %30 = arith.truncf %29 : vector<8x256xf32> to vector<8x256xbf16>
    %c0_21 = arith.constant 0 : index
    %c0_22 = arith.constant 0 : index
    %31 = vector.load %arg11[%c0_21, %c0_22] : memref<8x256xbf16, #tpu.memory_space<vmem>>, vector<8x256xbf16>
    tpu.vector_store %arg11[%c0_21, %c0_22], %30 {strides = array<i32>} : memref<8x256xbf16, #tpu.memory_space<vmem>>, vector<8x256xbf16>,
    %32 = arith.truncf %29 : vector<8x256xf32> to vector<8x256xbf16>
    %cst_23 = arith.constant dense<0.000000e+00> : vector<8x128xf32>
    %33 = tpu.matmul %32, %5, %cst_23 {dimension_numbers = #tpu.dot_dimension_numbers<[1], [0], [0], [1], [0, 0, 1, 1], [], []>} : vector<8x256xbf16>, vector<256x128xbf16>, vector<8x128xf32> -> vector<8x128xf32>
    %34 = arith.addf %8, %14 : vector<8x128xf32>
    %35 = arith.addf %33, %14 : vector<8x128xf32>
    %cst_24 = arith.constant 2.000000e-01 : f32
    %36 = vector.broadcast %cst_24 : f32 to vector<8x128xf32>
    %37 = arith.mulf %36, %34 : vector<8x128xf32>
    %38 = arith.maximumf %34, %37 : vector<8x128xf32>
    %cst_25 = arith.constant 2.000000e-01 : f32
    %39 = vector.broadcast %cst_25 : f32 to vector<8x128xf32>
    %40 = arith.mulf %39, %35 : vector<8x128xf32>
    %41 = arith.maximumf %35, %40 : vector<8x128xf32>
    %42 = vector.broadcast %3 : vector<1x128xf32> to vector<8x128xf32>
    %43 = arith.mulf %38, %42 : vector<8x128xf32>
    %cst_26 = arith.constant dense<0.000000e+00> : vector<8xf32>
    %44 = vector.multi_reduction <add>, %43, %cst_26 [1] : vector<8x128xf32> to vector<8xf32>
    %45 = vector.shape_cast %44 : vector<8xf32> to vector<8x1xf32>
    %46 = vector.broadcast %4 : vector<1x1xf32> to vector<8x1xf32>
    %47 = arith.addf %45, %46 : vector<8x1xf32>
    %48 = vector.broadcast %3 : vector<1x128xf32> to vector<8x128xf32>
    %49 = arith.mulf %41, %48 : vector<8x128xf32>
    %cst_27 = arith.constant dense<0.000000e+00> : vector<8xf32>
    %50 = vector.multi_reduction <add>, %49, %cst_27 [1] : vector<8x128xf32> to vector<8xf32>
    %51 = vector.shape_cast %50 : vector<8xf32> to vector<8x1xf32>
    %52 = vector.broadcast %4 : vector<1x1xf32> to vector<8x1xf32>
    %53 = arith.addf %51, %52 : vector<8x1xf32>
    %c0_28 = arith.constant 0 : index
    %c0_29 = arith.constant 0 : index
    %54 = vector.load %arg3[%c0_28, %c0_29] : memref<8x1xf32, #tpu.memory_space<vmem>>, vector<8x1xf32>
    %55 = vector.broadcast %54 : vector<8x1xf32> to vector<8x128xf32>
    %56 = arith.mulf %55, %8 : vector<8x128xf32>
    %cst_30 = arith.constant 1.000000e+00 : f32
    %57 = vector.broadcast %cst_30 : f32 to vector<8x1xf32>
    %58 = arith.subf %57, %54 : vector<8x1xf32>
    %59 = vector.broadcast %58 : vector<8x1xf32> to vector<8x128xf32>
    %60 = arith.mulf %59, %33 : vector<8x128xf32>
    %61 = arith.addf %56, %60 : vector<8x128xf32>
    %62 = arith.addf %61, %14 : vector<8x128xf32>
    %cst_31 = arith.constant 0.000000e+00 : f32
    %63 = vector.broadcast %cst_31 : f32 to vector<8x128xf32>
    %64 = arith.cmpf ogt, %62, %63 : vector<8x128xf32>
    %cst_32 = arith.constant 1.000000e+00 : f32
    %cst_33 = arith.constant 2.000000e-01 : f32
    %65 = vector.broadcast %cst_32 : f32 to vector<8x128xf32>
    %66 = vector.broadcast %cst_33 : f32 to vector<8x128xf32>
    %67 = arith.select %64, %65, %66 : vector<8x128xi1>, vector<8x128xf32>
    %68 = vector.broadcast %3 : vector<1x128xf32> to vector<8x128xf32>
    %69 = arith.mulf %67, %68 : vector<8x128xf32>
    %70 = arith.truncf %69 : vector<8x128xf32> to vector<8x128xbf16>
    %cst_34 = arith.constant dense<0.000000e+00> : vector<8x256xf32>
    %71 = tpu.matmul %70, %5, %cst_34 {dimension_numbers = #tpu.dot_dimension_numbers<[1], [1], [0], [0], [0, 0, 1, 0], [], []>} : vector<8x128xbf16>, vector<256x128xbf16>, vector<8x256xf32> -> vector<8x256xf32>
    %72 = arith.mulf %71, %71 : vector<8x256xf32>
    %cst_35 = arith.constant dense<0.000000e+00> : vector<8xf32>
    %73 = vector.multi_reduction <add>, %72, %cst_35 [1] : vector<8x256xf32> to vector<8xf32>
    %74 = vector.shape_cast %73 : vector<8xf32> to vector<8x1xf32>
    %75 = math.sqrt %74 : vector<8x1xf32>
    %cst_36 = arith.constant 1.000000e+00 : f32
    %76 = vector.broadcast %cst_36 : f32 to vector<8x1xf32>
    %77 = arith.subf %75, %76 : vector<8x1xf32>
    %78 = arith.mulf %77, %77 : vector<8x1xf32>
    %cst_37 = arith.constant dense<0.000000e+00> : vector<1xf32>
    %79 = vector.multi_reduction <add>, %78, %cst_37 [0] : vector<8x1xf32> to vector<1xf32>
    %80 = vector.shape_cast %79 : vector<1xf32> to vector<1x1xf32>
    %cst_38 = arith.constant 1.250000e-01 : f32
    %81 = vector.broadcast %cst_38 : f32 to vector<1x1xf32>
    %82 = arith.mulf %80, %81 : vector<1x1xf32>
    %cst_39 = arith.constant dense<0.000000e+00> : vector<1xf32>
    %83 = vector.multi_reduction <add>, %47, %cst_39 [0] : vector<8x1xf32> to vector<1xf32>
    %84 = vector.shape_cast %83 : vector<1xf32> to vector<1x1xf32>
    %cst_40 = arith.constant 1.250000e-01 : f32
    %85 = vector.broadcast %cst_40 : f32 to vector<1x1xf32>
    %86 = arith.mulf %84, %85 : vector<1x1xf32>
    %cst_41 = arith.constant dense<0.000000e+00> : vector<1xf32>
    %87 = vector.multi_reduction <add>, %53, %cst_41 [0] : vector<8x1xf32> to vector<1xf32>
    %88 = vector.shape_cast %87 : vector<1xf32> to vector<1x1xf32>
    %cst_42 = arith.constant 1.250000e-01 : f32
    %89 = vector.broadcast %cst_42 : f32 to vector<1x1xf32>
    %90 = arith.mulf %88, %89 : vector<1x1xf32>
    %cst_43 = arith.constant 0.000000e+00 : f32
    %91 = vector.broadcast %cst_43 : f32 to vector<1x1xf32>
    %92 = arith.subf %91, %86 : vector<1x1xf32>
    %93 = arith.addf %92, %90 : vector<1x1xf32>
    %cst_44 = arith.constant 1.000000e+01 : f32
    %94 = vector.broadcast %cst_44 : f32 to vector<1x1xf32>
    %95 = arith.mulf %94, %82 : vector<1x1xf32>
    %96 = arith.addf %93, %95 : vector<1x1xf32>
    %cst_45 = arith.constant 0.000000e+00 : f32
    %97 = vector.broadcast %cst_45 : f32 to vector<1x1xf32>
    %98 = arith.subf %97, %90 : vector<1x1xf32>
    %99 = tpu.iota {dimensions = array<i32: 1>} : vector<1x128xi32>
    %c0_i32 = arith.constant 0 : i32
    %100 = vector.broadcast %c0_i32 : i32 to vector<1x128xi32>
    %101 = arith.cmpi eq, %99, %100 : vector<1x128xi32>
    %cst_46 = arith.constant 0.000000e+00 : f32
    %102 = vector.shape_cast %96 : vector<1x1xf32> to vector<1x1xf32>
    %103 = vector.broadcast %102 : vector<1x1xf32> to vector<1x128xf32>
    %104 = vector.broadcast %cst_46 : f32 to vector<1x128xf32>
    %105 = arith.select %101, %103, %104 : vector<1x128xi1>, vector<1x128xf32>
    %c1_i32 = arith.constant 1 : i32
    %106 = vector.broadcast %c1_i32 : i32 to vector<1x128xi32>
    %107 = arith.cmpi eq, %99, %106 : vector<1x128xi32>
    %cst_47 = arith.constant 0.000000e+00 : f32
    %108 = vector.shape_cast %98 : vector<1x1xf32> to vector<1x1xf32>
    %109 = vector.broadcast %108 : vector<1x1xf32> to vector<1x128xf32>
    %110 = vector.broadcast %cst_47 : f32 to vector<1x128xf32>
    %111 = arith.select %107, %109, %110 : vector<1x128xi1>, vector<1x128xf32>
    %112 = arith.addf %105, %111 : vector<1x128xf32>
    %c2_i32 = arith.constant 2 : i32
    %113 = vector.broadcast %c2_i32 : i32 to vector<1x128xi32>
    %114 = arith.cmpi eq, %99, %113 : vector<1x128xi32>
    %cst_48 = arith.constant 0.000000e+00 : f32
    %115 = vector.shape_cast %82 : vector<1x1xf32> to vector<1x1xf32>
    %116 = vector.broadcast %115 : vector<1x1xf32> to vector<1x128xf32>
    %117 = vector.broadcast %cst_48 : f32 to vector<1x128xf32>
    %118 = arith.select %114, %116, %117 : vector<1x128xi1>, vector<1x128xf32>
    %119 = arith.addf %112, %118 : vector<1x128xf32>
    %c0_49 = arith.constant 0 : index
    %c0_50 = arith.constant 0 : index
    %120 = vector.load %arg10[%c0_49, %c0_50] : memref<1x128xf32, #tpu.memory_space<vmem>>, vector<1x128xf32>
    tpu.vector_store %arg10[%c0_49, %c0_50], %119 {strides = array<i32>} : memref<1x128xf32, #tpu.memory_space<vmem>>, vector<1x128xf32>,
    return
  }
}

</mosaic_0001>

<llo_original>
// kernel: kgan_forward.1
$region0: #{kgan_forward.1}
  #allocation0 [shape = 'u32[]', space=smem, size = 0x4, offset = 0x4, fixed_abs, tag = 'smem constant byte address 0x4 - core index']
  #allocation1 [shape = 'u32[72,128]{1,0:T(1,128)}', space=vmem, size = 0x9000, scoped, tag = 'internal scratch']
  %s0 = inlined_call_operand.vmem [shape: f32[8,256], index: 0, kind: input, shape index: {}]
  %s1 = inlined_call_operand.vmem [shape: f32[8,64], index: 1, kind: input, shape index: {}]
  %s2 = inlined_call_operand.vmem [shape: f32[8,256], index: 2, kind: input, shape index: {}]
  %s3 = inlined_call_operand.vmem [shape: f32[8,1], index: 3, kind: input, shape index: {}]
  %s4 = inlined_call_operand.vmem [shape: bf16[64,128], index: 4, kind: input, shape index: {}]
  %s5 = inlined_call_operand.vmem [shape: bf16[128,256], index: 5, kind: input, shape index: {}]
  %s6 = inlined_call_operand.vmem [shape: f32[1,256], index: 6, kind: input, shape index: {}]
  %s7 = inlined_call_operand.vmem [shape: bf16[256,128], index: 7, kind: input, shape index: {}]
  %s8 = inlined_call_operand.vmem [shape: bf16[256,128], index: 8, kind: input, shape index: {}]
  %s9 = inlined_call_operand.vmem [shape: f32[4,128], index: 9, kind: input, shape index: {}]
  %s10 = inlined_call_operand.vmem [shape: f32[1,128], index: 10, kind: output, shape index: {0}]
  %s11 = inlined_call_operand.vmem [shape: bf16[8,256], index: 11, kind: output, shape index: {1}]
  %12 = xla_tuple %s10, %s11
  %s13 = sld [smem:[#allocation0]]
  $region58: #{kgan_forward.1} parent=0
    _
  %s15 = ssub.s32 1, %s13
  %s16 = scalar_select 0, %s15, %s13
  // Predicated region
  $region2: #{kgan_forward.1} parent=0 // pred_check
    _
  $region3: #{kgan_forward.1} parent=0 // pred_check_branch
    %18 = sbr.rel (0) target = $region5
  $region4: #{kgan_forward.1} parent=0 // pred_region
    _
  $region5: #{kgan_forward.1} parent=0 // pred_fallthru
    _
  // Predicated region
  $region6: #{kgan_forward.1} parent=0 // pred_check
    _
  $region7: #{kgan_forward.1} parent=0 // pred_check_branch
    %20 = sbr.rel (0) target = $region9
  $region8: #{kgan_forward.1} parent=0 // pred_region
    _
  $region9: #{kgan_forward.1} parent=0 // pred_fallthru
    _
  // Predicated region
  $region10: #{kgan_forward.1} parent=0 // pred_check
    _
  $region11: #{kgan_forward.1} parent=0 // pred_check_branch
    %22 = sbr.rel (0) target = $region13
  $region12: #{kgan_forward.1} parent=0 // pred_region
    _
  $region13: #{kgan_forward.1} parent=0 // pred_fallthru
    _
  // Predicated region
  $region14: #{kgan_forward.1} parent=0 // pred_check
    _
  $region15: #{kgan_forward.1} parent=0 // pred_check_branch
    %24 = sbr.rel (0) target = $region17
  $region16: #{kgan_forward.1} parent=0 // pred_region
    _
  $region17: #{kgan_forward.1} parent=0 // pred_fallthru
    _
  // Predicated region
  $region18: #{kgan_forward.1} parent=0 // pred_check
    _
  $region19: #{kgan_forward.1} parent=0 // pred_check_branch
    %26 = sbr.rel (0) target = $region21
  $region20: #{kgan_forward.1} parent=0 // pred_region
    _
  $region21: #{kgan_forward.1} parent=0 // pred_fallthru
    _
  // Predicated region
  $region22: #{kgan_forward.1} parent=0 // pred_check
    _
  $region23: #{kgan_forward.1} parent=0 // pred_check_branch
    %28 = sbr.rel (0) target = $region25
  $region24: #{kgan_forward.1} parent=0 // pred_region
    _
  $region25: #{kgan_forward.1} parent=0 // pred_fallthru
    _
  // Predicated region
  $region26: #{kgan_forward.1} parent=0 // pred_check
    _
  $region27: #{kgan_forward.1} parent=0 // pred_check_branch
    %30 = sbr.rel (0) target = $region29
  $region28: #{kgan_forward.1} parent=0 // pred_region
    _
  $region29: #{kgan_forward.1} parent=0 // pred_fallthru
    _
  // Predicated region
  $region30: #{kgan_forward.1} parent=0 // pred_check
    _
  $region31: #{kgan_forward.1} parent=0 // pred_check_branch
    %32 = sbr.rel (0) target = $region33
  $region32: #{kgan_forward.1} parent=0 // pred_region
    _
  $region33: #{kgan_forward.1} parent=0 // pred_fallthru
    _
  // Predicated region
  $region34: #{kgan_forward.1} parent=0 // pred_check
    _
  $region35: #{kgan_forward.1} parent=0 // pred_check_branch
    %34 = sbr.rel (0) target = $region37
  $region36: #{kgan_forward.1} parent=0 // pred_region
    _
  $region37: #{kgan_forward.1} parent=0 // pred_fallthru
    _
  // Predicated region
  $region38: #{kgan_forward.1} parent=0 // pred_check
    _
  $region39: #{kgan_forward.1} parent=0 // pred_check_branch
    %36 = sbr.rel (0) target = $region41
  $region40: #{kgan_forward.1} parent=0 // pred_region
    _
  $region41: #{kgan_forward.1} parent=0 // pred_fallthru
    _
  %v38 = vld [vmem:[%s9] sm:$0xf]
  %v39 = vld [vmem:[%s7] sm:$0xf]
  %v40 = vld [vmem:[%s7 + $0x4] sm:$0xf]
  %v41 = vld [vmem:[%s7 + $0x8] sm:$0xf]
  %v42 = vld [vmem:[%s7 + $0xc] sm:$0xf]
  %v43 = vld [vmem:[%s7 + $0x10] sm:$0xf]
  %v44 = vld [vmem:[%s7 + $0x14] sm:$0xf]
  %v45 = vld [vmem:[%s7 + $0x18] sm:$0xf]
  %v46 = vld [vmem:[%s7 + $0x1c] sm:$0xf]
  %v47 = vld [vmem:[%s7 + $0x20] sm:$0xf]
  %v48 = vld [vmem:[%s7 + $0x24] sm:$0xf]
  %v49 = vld [vmem:[%s7 + $0x28] sm:$0xf]
  %v50 = vld [vmem:[%s7 + $0x2c] sm:$0xf]
  %v51 = vld [vmem:[%s7 + $0x30] sm:$0xf]
  %v52 = vld [vmem:[%s7 + $0x34] sm:$0xf]
  %v53 = vld [vmem:[%s7 + $0x38] sm:$0xf]
  %v54 = vld [vmem:[%s7 + $0x3c] sm:$0xf]
  %v55 = vld [vmem:[%s7 + $0x40] sm:$0xf]
  %v56 = vld [vmem:[%s7 + $0x44] sm:$0xf]
  %v57 = vld [vmem:[%s7 + $0x48] sm:$0xf]
  %v58 = vld [vmem:[%s7 + $0x4c] sm:$0xf]
  %v59 = vld [vmem:[%s7 + $0x50] sm:$0xf]
  %v60 = vld [vmem:[%s7 + $0x54] sm:$0xf]
  %v61 = vld [vmem:[%s7 + $0x58] sm:$0xf]
  %v62 = vld [vmem:[%s7 + $0x5c] sm:$0xf]
  %v63 = vld [vmem:[%s7 + $0x60] sm:$0xf]
  %v64 = vld [vmem:[%s7 + $0x64] sm:$0xf]
  %v65 = vld [vmem:[%s7 + $0x68] sm:$0xf]
  %v66 = vld [vmem:[%s7 + $0x6c] sm:$0xf]
  %v67 = vld [vmem:[%s7 + $0x70] sm:$0xf]
  %v68 = vld [vmem:[%s7 + $0x74] sm:$0xf]
  %v69 = vld [vmem:[%s7 + $0x78] sm:$0xf]
  %v70 = vld [vmem:[%s7 + $0x7c] sm:$0xf]
  %v71 = vld [vmem:[%s0] sm:$0xff]
  %v72 = vld [vmem:[%s0 + $0x8] sm:$0xff]
  %v73 = vpack.c.bf16 %v71, %v71
  %v74 = vpack.c.bf16 %v72, %v72
  %v107 = vunpack.c.l.b16 %v39
  %v108 = vunpack.c.l.b16 %v40
  %v109 = vunpack.c.l.b16 %v41
  %v110 = vunpack.c.l.b16 %v42
  %v111 = vunpack.c.l.b16 %v43
  %v112 = vunpack.c.l.b16 %v44
  %v113 = vunpack.c.l.b16 %v45
  %v114 = vunpack.c.l.b16 %v46
  %v115 = vunpack.c.l.b16 %v47
  %v116 = vunpack.c.l.b16 %v48
  %v117 = vunpack.c.l.b16 %v49
  %v118 = vunpack.c.l.b16 %v50
  %v119 = vunpack.c.l.b16 %v51
  %v120 = vunpack.c.l.b16 %v52
  %v121 = vunpack.c.l.b16 %v53
  %v122 = vunpack.c.l.b16 %v54
  %v123 = vunpack.c.l.b16 %v55
  %v124 = vunpack.c.l.b16 %v56
  %v125 = vunpack.c.l.b16 %v57
  %v126 = vunpack.c.l.b16 %v58
  %v127 = vunpack.c.l.b16 %v59
  %v128 = vunpack.c.l.b16 %v60
  %v129 = vunpack.c.l.b16 %v61
  %v130 = vunpack.c.l.b16 %v62
  %v131 = vunpack.c.l.b16 %v63
  %v132 = vunpack.c.l.b16 %v64
  %v133 = vunpack.c.l.b16 %v65
  %v134 = vunpack.c.l.b16 %v66
  %v135 = vunpack.c.l.b16 %v67
  %v136 = vunpack.c.l.b16 %v68
  %v137 = vunpack.c.l.b16 %v69
  %v138 = vunpack.c.l.b16 %v70
  %v139 = vpack.c.b16 %v108, %v107
  %v140 = vpack.c.b16 %v110, %v109
  %v141 = vpack.c.b16 %v112, %v111
  %v142 = vpack.c.b16 %v114, %v113
  %v143 = vpack.c.b16 %v116, %v115
  %v144 = vpack.c.b16 %v118, %v117
  %v145 = vpack.c.b16 %v120, %v119
  %v146 = vpack.c.b16 %v122, %v121
  %v147 = vpack.c.b16 %v124, %v123
  %v148 = vpack.c.b16 %v126, %v125
  %v149 = vpack.c.b16 %v128, %v127
  %v150 = vpack.c.b16 %v130, %v129
  %v151 = vpack.c.b16 %v132, %v131
  %v152 = vpack.c.b16 %v134, %v133
  %v153 = vpack.c.b16 %v136, %v135
  %v154 = vpack.c.b16 %v138, %v137
  %171 = vmatpush.bf16.msra.mxu0 %v146
  %172 = vmatpush.bf16.msra.mxu0 %v145
  %173 = vmatpush.bf16.msra.mxu0 %v144
  %174 = vmatpush.bf16.msra.mxu0 %v143
  %175 = vmatpush.bf16.msra.mxu0 %v142
  %176 = vmatpush.bf16.msra.mxu0 %v141
  %177 = vmatpush.bf16.msra.mxu0 %v140
  %178 = vmatpush.bf16.msra.mxu0 %v139
  %179 = vmatmul.bf16.gmra.mxu0 %v73
  %v180 = vpop.f32.mrf.mxu0
  %v181 = vadd.f32 0.0, %v180
  %v182 = vpop.f32.mrf.mxu0
  %183 = vdwg.mxu0
  %184 = vmatpush.bf16.msra.mxu0 %v154
  %185 = vmatpush.bf16.msra.mxu0 %v153
  %186 = vmatpush.bf16.msra.mxu0 %v152
  %187 = vmatpush.bf16.msra.mxu0 %v151
  %188 = vmatpush.bf16.msra.mxu0 %v150
  %189 = vmatpush.bf16.msra.mxu0 %v149
  %190 = vmatpush.bf16.msra.mxu0 %v148
  %191 = vmatpush.bf16.msra.mxu0 %v147
  %192 = vmatmul.bf16.gmra.mxu0 %v74
  %v193 = vpop.f32.mrf.mxu0
  %v194 = vadd.f32 %v181, %v193
  %v195 = vpop.f32.mrf.mxu0
  %196 = vdwg.mxu0
  %v197 = vld [vmem:[%s2] sm:$0xff]
  %v198 = vld [vmem:[%s2 + $0x8] sm:$0xff]
  %v199 = vpack.c.bf16 %v197, %v197
  %v200 = vpack.c.bf16 %v198, %v198
  %v201 = vld [vmem:[%s8] sm:$0xf]
  %v202 = vld [vmem:[%s8 + $0x4] sm:$0xf]
  %v203 = vld [vmem:[%s8 + $0x8] sm:$0xf]
  %v204 = vld [vmem:[%s8 + $0xc] sm:$0xf]
  %v205 = vld [vmem:[%s8 + $0x10] sm:$0xf]
  %v206 = vld [vmem:[%s8 + $0x14] sm:$0xf]
  %v207 = vld [vmem:[%s8 + $0x18] sm:$0xf]
  %v208 = vld [vmem:[%s8 + $0x1c] sm:$0xf]
  %v209 = vld [vmem:[%s8 + $0x20] sm:$0xf]
  %v210 = vld [vmem:[%s8 + $0x24] sm:$0xf]
  %v211 = vld [vmem:[%s8 + $0x28] sm:$0xf]
  %v212 = vld [vmem:[%s8 + $0x2c] sm:$0xf]
  %v213 = vld [vmem:[%s8 + $0x30] sm:$0xf]
  %v214 = vld [vmem:[%s8 + $0x34] sm:$0xf]
  %v215 = vld [vmem:[%s8 + $0x38] sm:$0xf]
  %v216 = vld [vmem:[%s8 + $0x3c] sm:$0xf]
  %v217 = vld [vmem:[%s8 + $0x40] sm:$0xf]
  %v218 = vld [vmem:[%s8 + $0x44] sm:$0xf]
  %v219 = vld [vmem:[%s8 + $0x48] sm:$0xf]
  %v220 = vld [vmem:[%s8 + $0x4c] sm:$0xf]
  %v221 = vld [vmem:[%s8 + $0x50] sm:$0xf]
  %v222 = vld [vmem:[%s8 + $0x54] sm:$0xf]
  %v223 = vld [vmem:[%s8 + $0x58] sm:$0xf]
  %v224 = vld [vmem:[%s8 + $0x5c] sm:$0xf]
  %v225 = vld [vmem:[%s8 + $0x60] sm:$0xf]
  %v226 = vld [vmem:[%s8 + $0x64] sm:$0xf]
  %v227 = vld [vmem:[%s8 + $0x68] sm:$0xf]
  %v228 = vld [vmem:[%s8 + $0x6c] sm:$0xf]
  %v229 = vld [vmem:[%s8 + $0x70] sm:$0xf]
  %v230 = vld [vmem:[%s8 + $0x74] sm:$0xf]
  %v231 = vld [vmem:[%s8 + $0x78] sm:$0xf]
  %v232 = vld [vmem:[%s8 + $0x7c] sm:$0xf]
  %v233 = vperm.slane %v38, 1
  %v266 = vunpack.c.l.b16 %v201
  %v267 = vunpack.c.l.b16 %v202
  %v268 = vunpack.c.l.b16 %v203
  %v269 = vunpack.c.l.b16 %v204
  %v270 = vunpack.c.l.b16 %v205
  %v271 = vunpack.c.l.b16 %v206
  %v272 = vunpack.c.l.b16 %v207
  %v273 = vunpack.c.l.b16 %v208
  %v274 = vunpack.c.l.b16 %v209
  %v275 = vunpack.c.l.b16 %v210
  %v276 = vunpack.c.l.b16 %v211
  %v277 = vunpack.c.l.b16 %v212
  %v278 = vunpack.c.l.b16 %v213
  %v279 = vunpack.c.l.b16 %v214
  %v280 = vunpack.c.l.b16 %v215
  %v281 = vunpack.c.l.b16 %v216
  %v282 = vunpack.c.l.b16 %v217
  %v283 = vunpack.c.l.b16 %v218
  %v284 = vunpack.c.l.b16 %v219
  %v285 = vunpack.c.l.b16 %v220
  %v286 = vunpack.c.l.b16 %v221
  %v287 = vunpack.c.l.b16 %v222
  %v288 = vunpack.c.l.b16 %v223
  %v289 = vunpack.c.l.b16 %v224
  %v290 = vunpack.c.l.b16 %v225
  %v291 = vunpack.c.l.b16 %v226
  %v292 = vunpack.c.l.b16 %v227
  %v293 = vunpack.c.l.b16 %v228
  %v294 = vunpack.c.l.b16 %v229
  %v295 = vunpack.c.l.b16 %v230
  %v296 = vunpack.c.l.b16 %v231
  %v297 = vunpack.c.l.b16 %v232
  %v298 = vpack.c.b16 %v267, %v266
  %v299 = vpack.c.b16 %v269, %v268
  %v300 = vpack.c.b16 %v271, %v270
  %v301 = vpack.c.b16 %v273, %v272
  %v302 = vpack.c.b16 %v275, %v274
  %v303 = vpack.c.b16 %v277, %v276
  %v304 = vpack.c.b16 %v279, %v278
  %v305 = vpack.c.b16 %v281, %v280
  %v306 = vpack.c.b16 %v283, %v282
  %v307 = vpack.c.b16 %v285, %v284
  %v308 = vpack.c.b16 %v287, %v286
  %v309 = vpack.c.b16 %v289, %v288
  %v310 = vpack.c.b16 %v291, %v290
  %v311 = vpack.c.b16 %v293, %v292
  %v312 = vpack.c.b16 %v295, %v294
  %v313 = vpack.c.b16 %v297, %v296
  %330 = vmatpush.bf16.msra.mxu0 %v305
  %331 = vmatpush.bf16.msra.mxu0 %v304
  %332 = vmatpush.bf16.msra.mxu0 %v303
  %333 = vmatpush.bf16.msra.mxu0 %v302
  %334 = vmatpush.bf16.msra.mxu0 %v301
  %335 = vmatpush.bf16.msra.mxu0 %v300
  %336 = vmatpush.bf16.msra.mxu0 %v299
  %337 = vmatpush.bf16.msra.mxu0 %v298
  %338 = vmatmul.bf16.gmra.mxu0 %v199
  %v339 = vpop.f32.mrf.mxu0
  %v340 = vadd.f32 %v233, %v339
  %v341 = vpop.f32.mrf.mxu0
  %342 = vdwg.mxu0
  %343 = vmatpush.bf16.msra.mxu0 %v313
  %344 = vmatpush.bf16.msra.mxu0 %v312
  %345 = vmatpush.bf16.msra.mxu0 %v311
  %346 = vmatpush.bf16.msra.mxu0 %v310
  %347 = vmatpush.bf16.msra.mxu0 %v309
  %348 = vmatpush.bf16.msra.mxu0 %v308
  %349 = vmatpush.bf16.msra.mxu0 %v307
  %350 = vmatpush.bf16.msra.mxu0 %v306
  %351 = vmatmul.bf16.gmra.mxu0 %v200
  %v352 = vpop.f32.mrf.mxu0
  %v353 = vadd.f32 %v340, %v352
  %v354 = vpop.f32.mrf.mxu0
  %355 = vdwg.mxu0
  %v356 = vld [vmem:[%s1] sm:$0xff]
  %v357 = vpack.c.bf16 %v356, %v356
  %v358 = vld [vmem:[%s4] sm:$0xf]
  %v359 = vld [vmem:[%s4 + $0x4] sm:$0xf]
  %v360 = vld [vmem:[%s4 + $0x8] sm:$0xf]
  %v361 = vld [vmem:[%s4 + $0xc] sm:$0xf]
  %v362 = vld [vmem:[%s4 + $0x10] sm:$0xf]
  %v363 = vld [vmem:[%s4 + $0x14] sm:$0xf]
  %v364 = vld [vmem:[%s4 + $0x18] sm:$0xf]
  %v365 = vld [vmem:[%s4 + $0x1c] sm:$0xf]
  %v366 = vperm.slane %v38, 0
  %v375 = vunpack.c.l.b16 %v358
  %v376 = vunpack.c.l.b16 %v359
  %v377 = vunpack.c.l.b16 %v360
  %v378 = vunpack.c.l.b16 %v361
  %v379 = vunpack.c.l.b16 %v362
  %v380 = vunpack.c.l.b16 %v363
  %v381 = vunpack.c.l.b16 %v364
  %v382 = vunpack.c.l.b16 %v365
  %v383 = vpack.c.b16 %v376, %v375
  %v384 = vpack.c.b16 %v378, %v377
  %v385 = vpack.c.b16 %v380, %v379
  %v386 = vpack.c.b16 %v382, %v381
  %vm391 = vcmask 523264
  %v393 = vsel %vm391, %v357, 0
  %395 = vmatpush.bf16.msra.mxu0 0
  %396 = vmatpush.bf16.msra.mxu0 0
  %397 = vmatpush.bf16.msra.mxu0 0
  %398 = vmatpush.bf16.msra.mxu0 0
  %399 = vmatpush.bf16.msra.mxu0 %v386
  %400 = vmatpush.bf16.msra.mxu0 %v385
  %401 = vmatpush.bf16.msra.mxu0 %v384
  %402 = vmatpush.bf16.msra.mxu0 %v383
  %403 = vmatmul.bf16.gmra.mxu0 %v393
  %v404 = vpop.f32.mrf.mxu0
  %v405 = vadd.f32 %v366, %v404
  %v406 = vpop.f32.mrf.mxu0
  %407 = vdwg.mxu0
  %v408 = vmax.f32 %v405, 0.0
  %v409 = vpack.c.bf16 %v408, %v408
  %v410 = vld [vmem:[%s5] sm:$0xff]
  %v411 = vld [vmem:[%s5 + $0x8] sm:$0xff]
  %v412 = vld [vmem:[%s5 + $0x10] sm:$0xff]
  %v413 = vld [vmem:[%s5 + $0x18] sm:$0xff]
  %v414 = vld [vmem:[%s5 + $0x20] sm:$0xff]
  %v415 = vld [vmem:[%s5 + $0x28] sm:$0xff]
  %v416 = vld [vmem:[%s5 + $0x30] sm:$0xff]
  %v417 = vld [vmem:[%s5 + $0x38] sm:$0xff]
  %v418 = vld [vmem:[%s5 + $0x40] sm:$0xff]
  %v419 = vld [vmem:[%s5 + $0x48] sm:$0xff]
  %v420 = vld [vmem:[%s5 + $0x50] sm:$0xff]
  %v421 = vld [vmem:[%s5 + $0x58] sm:$0xff]
  %v422 = vld [vmem:[%s5 + $0x60] sm:$0xff]
  %v423 = vld [vmem:[%s5 + $0x68] sm:$0xff]
  %v424 = vld [vmem:[%s5 + $0x70] sm:$0xff]
  %v425 = vld [vmem:[%s5 + $0x78] sm:$0xff]
  %v426 = vld [vmem:[%s6] sm:$0x3]
  %v428 = vperm.slane %v426, 0
  %v429 = vperm.slane %v426, 1
  %v448 = vunpack.c.l.b16 %v410
  %v449 = vunpack.c.h.b16 %v410
  %v450 = vunpack.c.l.b16 %v411
  %v451 = vunpack.c.h.b16 %v411
  %v452 = vunpack.c.l.b16 %v412
  %v453 = vunpack.c.h.b16 %v412
  %v454 = vunpack.c.l.b16 %v413
  %v455 = vunpack.c.h.b16 %v413
  %v456 = vunpack.c.l.b16 %v414
  %v457 = vunpack.c.h.b16 %v414
  %v458 = vunpack.c.l.b16 %v415
  %v459 = vunpack.c.h.b16 %v415
  %v460 = vunpack.c.l.b16 %v416
  %v461 = vunpack.c.h.b16 %v416
  %v462 = vunpack.c.l.b16 %v417
  %v463 = vunpack.c.h.b16 %v417
  %v464 = vunpack.c.l.b16 %v418
  %v465 = vunpack.c.h.b16 %v418
  %v466 = vunpack.c.l.b16 %v419
  %v467 = vunpack.c.h.b16 %v419
  %v468 = vunpack.c.l.b16 %v420
  %v469 = vunpack.c.h.b16 %v420
  %v470 = vunpack.c.l.b16 %v421
  %v471 = vunpack.c.h.b16 %v421
  %v472 = vunpack.c.l.b16 %v422
  %v473 = vunpack.c.h.b16 %v422
  %v474 = vunpack.c.l.b16 %v423
  %v475 = vunpack.c.h.b16 %v423
  %v476 = vunpack.c.l.b16 %v424
  %v477 = vunpack.c.h.b16 %v424
  %v478 = vunpack.c.l.b16 %v425
  %v479 = vunpack.c.h.b16 %v425
  %v480 = vpack.c.b16 %v450, %v448
  %v481 = vpack.c.b16 %v451, %v449
  %v482 = vpack.c.b16 %v454, %v452
  %v483 = vpack.c.b16 %v455, %v453
  %v484 = vpack.c.b16 %v458, %v456
  %v485 = vpack.c.b16 %v459, %v457
  %v486 = vpack.c.b16 %v462, %v460
  %v487 = vpack.c.b16 %v463, %v461
  %v488 = vpack.c.b16 %v466, %v464
  %v489 = vpack.c.b16 %v467, %v465
  %v490 = vpack.c.b16 %v470, %v468
  %v491 = vpack.c.b16 %v471, %v469
  %v492 = vpack.c.b16 %v474, %v472
  %v493 = vpack.c.b16 %v475, %v473
  %v494 = vpack.c.b16 %v478, %v476
  %v495 = vpack.c.b16 %v479, %v477
  %512 = vmatpush.bf16.msra.mxu0 %v494
  %513 = vmatpush.bf16.msra.mxu0 %v492
  %514 = vmatpush.bf16.msra.mxu0 %v490
  %515 = vmatpush.bf16.msra.mxu0 %v488
  %516 = vmatpush.bf16.msra.mxu0 %v486
  %517 = vmatpush.bf16.msra.mxu0 %v484
  %518 = vmatpush.bf16.msra.mxu0 %v482
  %519 = vmatpush.bf16.msra.mxu0 %v480
  %520 = vmatmul.bf16.gmra.mxu0 %v409
  %v521 = vpop.f32.mrf.mxu0
  %v522 = vadd.f32 %v428, %v521
  %v523 = vpop.f32.mrf.mxu0
  %524 = vdwg.mxu0
  %525 = vmatpush.bf16.msra.mxu0 %v495
  %526 = vmatpush.bf16.msra.mxu0 %v493
  %527 = vmatpush.bf16.msra.mxu0 %v491
  %528 = vmatpush.bf16.msra.mxu0 %v489
  %529 = vmatpush.bf16.msra.mxu0 %v487
  %530 = vmatpush.bf16.msra.mxu0 %v485
  %531 = vmatpush.bf16.msra.mxu0 %v483
  %532 = vmatpush.bf16.msra.mxu0 %v481
  %533 = vmatmul.bf16.gmra.mxu0 %v409
  %v534 = vpop.f32.mrf.mxu0
  %v535 = vadd.f32 %v429, %v534
  %v536 = vpop.f32.mrf.mxu0
  %537 = vdwg.mxu0
  %v538 = vtanh.pop %v522
  %v539 = vtanh.pop %v535
  %v540 = vpack.c.bf16 %v539, %v538
  %541 = vst [vmem:[%s11] sm:$0xff] %v540
  %v543 = vunpack.c.l.b16 %v540
  %v544 = vunpack.c.h.b16 %v540
  %v545 = vpack.c.b16 %v543, %v543
  %v546 = vpack.c.b16 %v544, %v544
  %549 = vmatpush.bf16.msra.mxu0 %v146
  %550 = vmatpush.bf16.msra.mxu0 %v145
  %551 = vmatpush.bf16.msra.mxu0 %v144
  %552 = vmatpush.bf16.msra.mxu0 %v143
  %553 = vmatpush.bf16.msra.mxu0 %v142
  %554 = vmatpush.bf16.msra.mxu0 %v141
  %555 = vmatpush.bf16.msra.mxu0 %v140
  %556 = vmatpush.bf16.msra.mxu0 %v139
  %557 = vmatmul.bf16.gmra.mxu0 %v545
  %v558 = vpop.f32.mrf.mxu0
  %v559 = vadd.f32 0.0, %v558
  %v560 = vpop.f32.mrf.mxu0
  %561 = vdwg.mxu0
  %562 = vmatpush.bf16.msra.mxu0 %v154
  %563 = vmatpush.bf16.msra.mxu0 %v153
  %564 = vmatpush.bf16.msra.mxu0 %v152
  %565 = vmatpush.bf16.msra.mxu0 %v151
  %566 = vmatpush.bf16.msra.mxu0 %v150
  %567 = vmatpush.bf16.msra.mxu0 %v149
  %568 = vmatpush.bf16.msra.mxu0 %v148
  %569 = vmatpush.bf16.msra.mxu0 %v147
  %570 = vmatmul.bf16.gmra.mxu0 %v546
  %v571 = vpop.f32.mrf.mxu0
  %v572 = vadd.f32 %v559, %v571
  %v573 = vpop.f32.mrf.mxu0
  %574 = vdwg.mxu0
  %v575 = vadd.f32 %v194, %v353
  %v576 = vadd.f32 %v572, %v353
  %v577 = vmul.f32 %v575, 0.2
  %v578 = vmax.f32 %v575, %v577
  %v579 = vmul.f32 %v576, 0.2
  %v580 = vmax.f32 %v576, %v579
  %v581 = vperm.slane %v38, 2
  %v582 = vmul.f32 %v578, %v581
  %583 = vadd.xlane.f32.xlu0 %v582
  %v584 = vpop.xlane.xlu0 %583
  %v585 = vperm.slane %v38, 3
  %v586 = vadd.f32 %v584, %v585
  %v587 = vmul.f32 %v580, %v581
  %588 = vadd.xlane.f32.xlu0 %v587
  %v589 = vpop.xlane.xlu0 %588
  %v590 = vadd.f32 %v589, %v585
  %v591 = vld [vmem:[%s3] sm:$0xff]
  %593 = vset.pattern.permute.xlu0 0
  %594 = vperm.xlu0 %593, %v591
  %v595 = vpop.permute.xlu0 %594
  %v597 = vmul.f32 %v595, %v194
  %v598 = vsub.f32 1.0, %v591
  %600 = vset.pattern.permute.xlu0 0
  %601 = vperm.xlu0 %600, %v598
  %v602 = vpop.permute.xlu0 %601
  %v604 = vmul.f32 %v602, %v572
  %v605 = vadd.f32 %v597, %v604
  %v606 = vadd.f32 %v605, %v353
  %vm607 = vcmp.gt.f32.partialorder %v606, 0.0
  %v608 = vsel %vm607, 1.0, 0.2
  %v609 = vmul.f32 %v608, %v581
  %v610 = vpack.c.bf16 %v609, %v609
  %611 = vmatpush.bf16.xpose.msra.mxu0 %v146
  %612 = vmatpush.bf16.xpose.msra.mxu0 %v145
  %613 = vmatpush.bf16.xpose.msra.mxu0 %v144
  %614 = vmatpush.bf16.xpose.msra.mxu0 %v143
  %615 = vmatpush.bf16.xpose.msra.mxu0 %v142
  %616 = vmatpush.bf16.xpose.msra.mxu0 %v141
  %617 = vmatpush.bf16.xpose.msra.mxu0 %v140
  %618 = vmatpush.bf16.xpose.msra.mxu0 %v139
  %619 = vmatmul.bf16.gmra.mxu0 %v610
  %v620 = vpop.f32.mrf.mxu0
  %v621 = vadd.f32 0.0, %v620
  %v622 = vpop.f32.mrf.mxu0
  %623 = vdwg.mxu0
  %624 = vmatpush.bf16.xpose.msra.mxu0 %v154
  %625 = vmatpush.bf16.xpose.msra.mxu0 %v153
  %626 = vmatpush.bf16.xpose.msra.mxu0 %v152
  %627 = vmatpush.bf16.xpose.msra.mxu0 %v151
  %628 = vmatpush.bf16.xpose.msra.mxu0 %v150
  %629 = vmatpush.bf16.xpose.msra.mxu0 %v149
  %630 = vmatpush.bf16.xpose.msra.mxu0 %v148
  %631 = vmatpush.bf16.xpose.msra.mxu0 %v147
  %632 = vmatmul.bf16.gmra.mxu0 %v610
  %v633 = vpop.f32.mrf.mxu0
  %v634 = vadd.f32 0.0, %v633
  %v635 = vpop.f32.mrf.mxu0
  %636 = vdwg.mxu0
  %v637 = vmul.f32 %v621, %v621
  %v638 = vmul.f32 %v634, %v634
  %v639 = vadd.f32 %v637, %v638
  %640 = vadd.xlane.f32.xlu0 %v639
  %v641 = vpop.xlane.xlu0 %640
  %v642 = vrsqrt.pop %v641
  %v643 = vmul.f32 %v642, %v641
  %v644 = vmul.f32 %v643, %v642
  %v645 = vmul.f32 0.5, %v644
  %v646 = vsub.f32 1.5, %v645
  %v647 = vmul.f32 %v642, %v646
  %v648 = vmul.f32 %v641, %v647
  %vm649 = vcmp.eq.f32.partialorder %v641, inf
  %v650 = vsel %vm649, %v641, %v648
  %vm651 = vcmp.eq.f32.partialorder %v641, 0.0
  %v652 = vand.u32 %v641, 2147483648
  %v653 = vsel %vm651, %v652, %v650
  %v654 = vsub.f32 %v653, 1.0
  %v655 = vmul.f32 %v654, %v654
  %v656 = vrot.slane %v655, 4
  %v657 = vadd.f32 %v655, %v656
  %v658 = vrot.slane %v657, 2
  %v659 = vadd.f32 %v657, %v658
  %v660 = vrot.slane %v659, 1
  %v661 = vadd.f32 %v659, %v660
  %v662 = vmul.f32 %v661, 0.125
  %vm663 = vcmask 7168
  %v664 = vsel %vm663, %v586, 0.0
  %v665 = vrot.slane %v664, 4
  %v666 = vadd.f32 %v664, %v665
  %v667 = vrot.slane %v666, 2
  %v668 = vadd.f32 %v666, %v667
  %v669 = vrot.slane %v668, 1
  %v670 = vadd.f32 %v668, %v669
  %v671 = vmul.f32 %v670, 0.125
  %v672 = vsel %vm663, %v590, 0.0
  %v673 = vrot.slane %v672, 4
  %v674 = vadd.f32 %v672, %v673
  %v675 = vrot.slane %v674, 2
  %v676 = vadd.f32 %v674, %v675
  %v677 = vrot.slane %v676, 1
  %v678 = vadd.f32 %v676, %v677
  %v679 = vmul.f32 %v678, 0.125
  %v680 = vsub.f32 0.0, %v671
  %v681 = vadd.f32 %v680, %v679
  %v682 = vmul.f32 %v662, 10.0
  %v683 = vadd.f32 %v681, %v682
  %v684 = vsub.f32 0.0, %v679
  %v685 = vlaneseq
  %v686 = vand.u32 %v685, 127
  %vm687 = vcmp.eq.s32.totalorder %v686, 0
  %689 = vset.pattern.permute.xlu0 0
  %690 = vperm.xlu0 %689, %v683
  %v691 = vpop.permute.xlu0 %690
  %v693 = vsel %vm687, %v691, 0.0
  %vm694 = vcmp.eq.s32.totalorder %v686, 1
  %696 = vset.pattern.permute.xlu0 0
  %697 = vperm.xlu0 %696, %v684
  %v698 = vpop.permute.xlu0 %697
  %v700 = vsel %vm694, %v698, 0.0
  %v701 = vadd.f32 %v693, %v700
  %vm702 = vcmp.eq.s32.totalorder %v686, 2
  %v703 = vsel %vm702, %v662, 0.0
  %v704 = vadd.f32 %v701, %v703
  %705 = vst [vmem:[%s10] sm:$0x1] %v704
  // Predicated region
  $region42: #{kgan_forward.1} parent=0 // pred_check
    _
  $region43: #{kgan_forward.1} parent=0 // pred_check_branch
    %707 = sbr.rel (0) target = $region45
  $region44: #{kgan_forward.1} parent=0 // pred_region
    _
  $region45: #{kgan_forward.1} parent=0 // pred_fallthru
    _
  // Predicated region
  $region46: #{kgan_forward.1} parent=0 // pred_check
    _
  $region47: #{kgan_forward.1} parent=0 // pred_check_branch
    %709 = sbr.rel (0) target = $region49
  $region48: #{kgan_forward.1} parent=0 // pred_region
    _
  $region49: #{kgan_forward.1} parent=0 // pred_fallthru
    _
  // Predicated region
  $region50: #{kgan_forward.1} parent=0 // pred_check
    _
  $region51: #{kgan_forward.1} parent=0 // pred_check_branch
    %711 = sbr.rel (0) target = $region53
  $region52: #{kgan_forward.1} parent=0 // pred_region
    _
  $region53: #{kgan_forward.1} parent=0 // pred_fallthru
    _
  // Predicated region
  $region54: #{kgan_forward.1} parent=0 // pred_check
    _
  $region55: #{kgan_forward.1} parent=0 // pred_check_branch
    %713 = sbr.rel (0) target = $region57
  $region56: #{kgan_forward.1} parent=0 // pred_region
    _
  $region57: #{kgan_forward.1} parent=0 // pred_fallthru
    _

</llo_original>
